<compile_context>
chip_gen: v7x
topology: tpu7x:2x2x1
jax: 0.10.0
libtpu: 0.0.40
codegen_flags: <defaults>
</compile_context>

<pallas_src>
import jax
import jax.numpy as jnp
from jax.experimental import pallas as pl
from jax.experimental.pallas import tpu as pltpu


def _make_kernel(enc_len_real, enc_len_pad, has_mask, compute_dtype):
    def kernel(*refs):
        if has_mask:
            w_ref, enc_ref, dec_ref, mask_ref, attn_ref, wts_ref = refs
        else:
            w_ref, enc_ref, dec_ref, attn_ref, wts_ref = refs

        tb, dec_len, h_dec = dec_ref.shape
        h_enc = enc_ref.shape[2]

        w = w_ref[...].astype(compute_dtype)                       # (Hd, He)
        enc3 = enc_ref[...].astype(compute_dtype)                  # (TB, Ep, He)

        # --- projection: one large-M MXU matmul over the whole batch tile ---
        dec2 = dec_ref[...].reshape(tb * dec_len, h_dec).astype(compute_dtype)
        proj = jnp.dot(dec2, w, preferred_element_type=jnp.float32)
        proj3 = proj.reshape(tb, dec_len, h_enc).astype(compute_dtype)

        # --- score: batched contraction on hidden axis (no enc.T copy) ---
        score = jnp.einsum('bdh,beh->bde', proj3, enc3,
                           preferred_element_type=jnp.float32)     # (TB, D, Ep)

        if has_mask:
            # PyTorch: score.masked_fill(enc_mask == 0, -1e12)
            score = jnp.where(mask_ref[...] != 0, score, -1e12)
        if enc_len_pad != enc_len_real:
            col = jax.lax.broadcasted_iota(jnp.int32, score.shape, 2)
            score = jnp.where(col < enc_len_real, score, -1e30)

        # --- softmax over enc_len, f32 math ---
        m = jnp.max(score, axis=-1, keepdims=True)
        e = jnp.exp(score - m)
        denom = jnp.sum(e, axis=-1, keepdims=True)
        weights = e * pl.reciprocal(denom, approx=True)            # (TB, D, Ep)

        # --- context vector ---
        attn = jnp.einsum('bde,beh->bdh', weights.astype(compute_dtype), enc3,
                          preferred_element_type=jnp.float32)      # (TB, D, He)

        attn_ref[...] = attn.astype(attn_ref.dtype)
        wts_ref[...] = weights.astype(wts_ref.dtype)

    return kernel


def _choose_batch_tile(batch, dec_len, enc_len_pad, h_enc, h_dec,
                       in_bytes, out_bytes,
                       budget_bytes=20 * 1024 * 1024, target_rows=256):
    """Biggest batch tile that (a) gives >=target_rows MXU rows, (b) fits VMEM budget."""
    tb = max(1, min(batch, -(-target_rows // dec_len)))

    def vmem_estimate(t):
        enc_blk = t * enc_len_pad * h_enc * in_bytes
        dec_blk = t * dec_len * h_dec * in_bytes
        attn_blk = t * dec_len * h_enc * out_bytes
        wts_blk = t * dec_len * enc_len_pad * out_bytes
        interm = t * dec_len * (enc_len_pad * 8 + h_enc * 8)   # f32 score/exp/proj/attn
        # x2: double-buffered pipelined blocks; + resident W
        return 2 * (enc_blk + dec_blk + attn_blk + wts_blk) + interm + h_dec * h_enc * 4

    while tb > 1 and vmem_estimate(tb) > budget_bytes:
        tb -= 1
    return tb


def luong_attention_general(encoder_outputs, decoder_outputs, general_weights,
                            enc_mask=None, matmul_dtype=None, vmem_limit_bytes=None):
    """Forward pass of LuongAttention(method='general').

    encoder_outputs : (enc_len, batch, hidden_enc)
    decoder_outputs : (dec_len, batch, hidden_dec)
    general_weights : (hidden_dec, hidden_enc)
    enc_mask        : optional (enc_len, batch); positions with 0 are masked out.
    matmul_dtype    : dtype for MXU operands (default: input dtype). Use
                      jnp.bfloat16 on v6e/v7x for peak MXU throughput.

    Returns:
      attention_vector : (dec_len, batch, hidden_enc)
      weights_flat     : (batch * dec_len, enc_len)
    """
    enc_len, batch, h_enc = encoder_outputs.shape
    dec_len, _, h_dec = decoder_outputs.shape
    out_dtype = encoder_outputs.dtype
    compute_dtype = out_dtype if matmul_dtype is None else matmul_dtype

    # Lane-dense score/weights last dim (multiple of 128).
    enc_len_p = ((enc_len + 127) // 128) * 128

    in_bytes = jnp.dtype(compute_dtype).itemsize
    out_bytes = jnp.dtype(out_dtype).itemsize
    tb = _choose_batch_tile(batch, dec_len, enc_len_p, h_enc, h_dec,
                            in_bytes, out_bytes)
    batch_p = ((batch + tb - 1) // tb) * tb

    # time-major -> batch-major + padding (cheap XLA glue; padded rows are zeros
    # and their softmax output is discarded below).
    enc_b = jnp.transpose(encoder_outputs, (1, 0, 2))       # (B, E, He)
    dec_b = jnp.transpose(decoder_outputs, (1, 0, 2))       # (B, D, Hd)
    enc_b = jnp.pad(enc_b, ((0, batch_p - batch), (0, enc_len_p - enc_len), (0, 0)))
    dec_b = jnp.pad(dec_b, ((0, batch_p - batch), (0, 0), (0, 0)))

    has_mask = enc_mask is not None
    inputs = [general_weights, enc_b, dec_b]
    in_specs = [
        pl.BlockSpec((h_dec, h_enc), lambda t: (0, 0)),                 # W, resident
        pl.BlockSpec((tb, enc_len_p, h_enc), lambda t: (t, 0, 0)),
        pl.BlockSpec((tb, dec_len, h_dec), lambda t: (t, 0, 0)),
    ]
    if has_mask:
        mask_b = jnp.transpose(enc_mask, (1, 0))[:, None, :].astype(jnp.int32)
        mask_b = jnp.pad(mask_b, ((0, batch_p - batch), (0, 0),
                                  (0, enc_len_p - enc_len)))
        inputs.append(mask_b)
        in_specs.append(pl.BlockSpec((tb, 1, enc_len_p), lambda t: (t, 0, 0)))

    kernel = _make_kernel(enc_len, enc_len_p, has_mask, compute_dtype)

    attn_b, wts_b = pl.pallas_call(
        kernel,
        out_shape=(
            jax.ShapeDtypeStruct((batch_p, dec_len, h_enc), out_dtype),
            jax.ShapeDtypeStruct((batch_p, dec_len, enc_len_p), out_dtype),
        ),
        grid_spec=pltpu.PrefetchScalarGridSpec(
            num_scalar_prefetch=0,
            grid=(batch_p // tb,),
            in_specs=in_specs,
            out_specs=[
                pl.BlockSpec((tb, dec_len, h_enc), lambda t: (t, 0, 0)),
                pl.BlockSpec((tb, dec_len, enc_len_p), lambda t: (t, 0, 0)),
            ],
        ),
        compiler_params=pltpu.CompilerParams(
            dimension_semantics=("parallel",),
            vmem_limit_bytes=vmem_limit_bytes),
    )(*inputs)

    # drop padding, batch-major -> time-major, flatten weights like the module
    attention_vector = jnp.transpose(attn_b[:batch], (1, 0, 2))
    weights_flat = wts_b[:batch, :, :enc_len].reshape(batch * dec_len, enc_len)
    return attention_vector, weights_flat


def _reference(encoder_outputs, decoder_outputs, general_weights, enc_mask=None):
    # Pure-JAX reference mirroring the PyTorch code exactly.
    enc_len = encoder_outputs.shape[0]
    dec_len = decoder_outputs.shape[0]
    dec = jnp.transpose(decoder_outputs, (1, 0, 2))            # (B, D, Hd)
    enc = jnp.transpose(encoder_outputs, (1, 2, 0))            # (B, He, E)
    score = jnp.einsum('bde,bef->bdf', dec @ general_weights, enc)
    if enc_mask is not None:
        m = jnp.transpose(enc_mask[:, None, :], (2, 1, 0))     # (B, 1, E)
        score = jnp.where(m == 0, -1e12, score)
    wts = jax.nn.softmax(score.reshape(-1, enc_len), axis=1)
    w3 = wts.reshape(-1, dec_len, enc_len)
    attn = jnp.einsum('bde,bef->bdf', w3, jnp.transpose(enc, (0, 2, 1)))
    return jnp.transpose(attn, (1, 0, 2)), w3.reshape(-1, enc_len)


if __name__ == "__main__":
    key = jax.random.PRNGKey(0)
    k1, k2, k3 = jax.random.split(key, 3)

    batch, enc_len, dec_len, hidden_enc, hidden_dec = 2, 8, 8, 32, 32

    encoder_outputs = jax.random.normal(k1, (enc_len, batch, hidden_enc), jnp.float32)
    decoder_outputs = jax.random.normal(k2, (dec_len, batch, hidden_dec), jnp.float32)
    general_weights = jax.random.normal(k3, (hidden_dec, hidden_enc), jnp.float32)

    # --- f32 path, no mask ---
    attn, wts = luong_attention_general(encoder_outputs, decoder_outputs, general_weights)
    jax.block_until_ready((attn, wts))
    ref_attn, ref_wts = _reference(encoder_outputs, decoder_outputs, general_weights)
    assert attn.shape == (dec_len, batch, hidden_enc)
    assert wts.shape == (batch * dec_len, enc_len)
    assert jnp.allclose(attn, ref_attn, atol=5e-3, rtol=5e-3)
    assert jnp.allclose(wts, ref_wts, atol=5e-3, rtol=5e-3)

    # --- f32 path with enc_mask (masked_fill(-1e12) semantics) ---
    enc_mask = jnp.ones((enc_len, batch), jnp.float32).at[5:, 1].set(0.0)
    attn_m, wts_m = luong_attention_general(
        encoder_outputs, decoder_outputs, general_weights, enc_mask=enc_mask)
    jax.block_until_ready((attn_m, wts_m))
    ref_attn_m, ref_wts_m = _reference(
        encoder_outputs, decoder_outputs, general_weights, enc_mask)
    assert jnp.allclose(attn_m, ref_attn_m, atol=5e-3, rtol=5e-3)
    assert jnp.allclose(wts_m, ref_wts_m, atol=5e-3, rtol=5e-3)

    # --- bf16 matmul-operand path (v6e/v7x MXU fast path; f32 accum + softmax) ---
    attn_bf, wts_bf = luong_attention_general(
        encoder_outputs.astype(jnp.bfloat16),
        decoder_outputs.astype(jnp.bfloat16),
        general_weights.astype(jnp.bfloat16))
    jax.block_until_ready((attn_bf, wts_bf))
    assert attn_bf.shape == (dec_len, batch, hidden_enc)
    assert wts_bf.shape == (batch * dec_len, enc_len)
    row_sums = jnp.sum(wts_bf.astype(jnp.float32), axis=-1)
    assert jnp.allclose(row_sums, 1.0, atol=5e-2)

    print("KERNEL_OK")
</pallas_src>

<mosaic_0001>
module attributes {stable_mosaic.version = 11 : i64} {
  func.func @kernel(%arg0: i32, %arg1: memref<32x32xf32, #tpu.memory_space<vmem>>, %arg2: memref<2x128x32xf32, #tpu.memory_space<vmem>>, %arg3: memref<2x8x32xf32, #tpu.memory_space<vmem>>, %arg4: memref<2x8x32xf32, #tpu.memory_space<vmem>>, %arg5: memref<2x8x128xf32, #tpu.memory_space<vmem>>) attributes {dimension_semantics = [#tpu.dimension_semantics<parallel>], iteration_bounds = array<i64: 1>, scalar_prefetch = 0 : i64, scratch_operands = 0 : i64, tpu.core_type = #tpu.core_type<tc>, window_params = [{pipeline_mode = #tpu.pipeline_mode<synchronous>, transform_indices = @transform_0, window_bounds = array<i64: 32, 32>}, {transform_indices = @transform_1, window_bounds = array<i64: 2, 128, 32>}, {transform_indices = @transform_2, window_bounds = array<i64: 2, 8, 32>}, {transform_indices = @transform_3, window_bounds = array<i64: 2, 8, 32>}, {transform_indices = @transform_4, window_bounds = array<i64: 2, 8, 128>}]} {
    %c0 = arith.constant 0 : index
    %c0_0 = arith.constant 0 : index
    %0 = vector.load %arg1[%c0, %c0_0] : memref<32x32xf32, #tpu.memory_space<vmem>>, vector<32x32xf32>
    %c0_1 = arith.constant 0 : index
    %c0_2 = arith.constant 0 : index
    %c0_3 = arith.constant 0 : index
    %1 = vector.load %arg2[%c0_1, %c0_2, %c0_3] : memref<2x128x32xf32, #tpu.memory_space<vmem>>, vector<2x128x32xf32>
    %c0_4 = arith.constant 0 : index
    %c0_5 = arith.constant 0 : index
    %c0_6 = arith.constant 0 : index
    %2 = vector.load %arg3[%c0_4, %c0_5, %c0_6] : memref<2x8x32xf32, #tpu.memory_space<vmem>>, vector<2x8x32xf32>
    %3 = vector.shape_cast %2 : vector<2x8x32xf32> to vector<16x32xf32>
    %cst = arith.constant dense<0.000000e+00> : vector<16x32xf32>
    %4 = tpu.matmul %3, %0, %cst {dimension_numbers = #tpu.dot_dimension_numbers<[1], [0], [0], [1], [0, 0, 1, 1], [], []>} : vector<16x32xf32>, vector<32x32xf32>, vector<16x32xf32> -> vector<16x32xf32>
    %5 = vector.shape_cast %4 : vector<16x32xf32> to vector<2x8x32xf32>
    "tpu.trace_start"() <{level = 10 : i32, message = "bdh,beh->bde"}> : () -> ()
    %cst_7 = arith.constant dense<0.000000e+00> : vector<2x8x128xf32>
    %6 = tpu.matmul %5, %1, %cst_7 {dimension_numbers = #tpu.dot_dimension_numbers<[2], [2], [1], [1], [0, 0, 0, 1, 1, 1], [0], [0]>} : vector<2x8x32xf32>, vector<2x128x32xf32>, vector<2x8x128xf32> -> vector<2x8x128xf32>
    "tpu.trace_stop"() : () -> ()
    %7 = tpu.iota {dimensions = array<i32: 2>} : vector<2x8x128xi32>
    %c8_i32 = arith.constant 8 : i32
    %8 = vector.broadcast %c8_i32 : i32 to vector<2x8x128xi32>
    %9 = arith.cmpi slt, %7, %8 : vector<2x8x128xi32>
    %cst_8 = arith.constant -1.000000e+30 : f32
    %10 = vector.broadcast %cst_8 : f32 to vector<2x8x128xf32>
    %11 = arith.select %9, %6, %10 : vector<2x8x128xi1>, vector<2x8x128xf32>
    %cst_9 = arith.constant dense<0xFF800000> : vector<2x8xf32>
    %12 = vector.multi_reduction <maximumf>, %11, %cst_9 [2] : vector<2x8x128xf32> to vector<2x8xf32>
    %13 = vector.shape_cast %12 : vector<2x8xf32> to vector<2x8x1xf32>
    %14 = vector.broadcast %13 : vector<2x8x1xf32> to vector<2x8x128xf32>
    %15 = arith.subf %11, %14 : vector<2x8x128xf32>
    %16 = math.exp %15 : vector<2x8x128xf32>
    %cst_10 = arith.constant dense<0.000000e+00> : vector<2x8xf32>
    %17 = vector.multi_reduction <add>, %16, %cst_10 [2] : vector<2x8x128xf32> to vector<2x8xf32>
    %18 = vector.shape_cast %17 : vector<2x8xf32> to vector<2x8x1xf32>
    %19 = tpu.reciprocal %18 {approx = true} : vector<2x8x1xf32> -> vector<2x8x1xf32>
    %20 = vector.broadcast %19 : vector<2x8x1xf32> to vector<2x8x128xf32>
    %21 = arith.mulf %16, %20 : vector<2x8x128xf32>
    "tpu.trace_start"() <{level = 10 : i32, message = "bde,beh->bdh"}> : () -> ()
    %cst_11 = arith.constant dense<0.000000e+00> : vector<2x8x32xf32>
    %22 = tpu.matmul %21, %1, %cst_11 {dimension_numbers = #tpu.dot_dimension_numbers<[2], [1], [1], [2], [0, 0, 0, 1, 1, 2], [0], [0]>} : vector<2x8x128xf32>, vector<2x128x32xf32>, vector<2x8x32xf32> -> vector<2x8x32xf32>
    "tpu.trace_stop"() : () -> ()
    %c0_12 = arith.constant 0 : index
    %c0_13 = arith.constant 0 : index
    %c0_14 = arith.constant 0 : index
    %23 = vector.load %arg4[%c0_12, %c0_13, %c0_14] : memref<2x8x32xf32, #tpu.memory_space<vmem>>, vector<2x8x32xf32>
    tpu.vector_store %arg4[%c0_12, %c0_13, %c0_14], %22 {strides = array<i32>} : memref<2x8x32xf32, #tpu.memory_space<vmem>>, vector<2x8x32xf32>,
    %c0_15 = arith.constant 0 : index
    %c0_16 = arith.constant 0 : index
    %c0_17 = arith.constant 0 : index
    %24 = vector.load %arg5[%c0_15, %c0_16, %c0_17] : memref<2x8x128xf32, #tpu.memory_space<vmem>>, vector<2x8x128xf32>
    tpu.vector_store %arg5[%c0_15, %c0_16, %c0_17], %21 {strides = array<i32>} : memref<2x8x128xf32, #tpu.memory_space<vmem>>, vector<2x8x128xf32>,
    return
  }
  func.func @transform_0(%arg0: i32) -> (i32, i32) {
    %c0_i32 = arith.constant 0 : i32
    %c0_i32_0 = arith.constant 0 : i32
    %c0_i32_1 = arith.constant 0 : i32
    return %c0_i32, %c0_i32_0 : i32, i32
  }
  func.func @transform_1(%arg0: i32) -> (i32, i32, i32) {
    %c0_i32 = arith.constant 0 : i32
    %c0_i32_0 = arith.constant 0 : i32
    %c0_i32_1 = arith.constant 0 : i32
    return %arg0, %c0_i32, %c0_i32_0 : i32, i32, i32
  }
  func.func @transform_2(%arg0: i32) -> (i32, i32, i32) {
    %c0_i32 = arith.constant 0 : i32
    %c0_i32_0 = arith.constant 0 : i32
    %c0_i32_1 = arith.constant 0 : i32
    return %arg0, %c0_i32, %c0_i32_0 : i32, i32, i32
  }
  func.func @transform_3(%arg0: i32) -> (i32, i32, i32) {
    %c0_i32 = arith.constant 0 : i32
    %c0_i32_0 = arith.constant 0 : i32
    %c0_i32_1 = arith.constant 0 : i32
    return %arg0, %c0_i32, %c0_i32_0 : i32, i32, i32
  }
  func.func @transform_4(%arg0: i32) -> (i32, i32, i32) {
    %c0_i32 = arith.constant 0 : i32
    %c0_i32_0 = arith.constant 0 : i32
    %c0_i32_1 = arith.constant 0 : i32
    return %arg0, %c0_i32, %c0_i32_0 : i32, i32, i32
  }
}

</mosaic_0001>

<llo_original>
// kernel: tpu_custom_call.1
$region0: #{tpu_custom_call.1}
  #allocation0 [shape = 'u32[]', space=smem, size = 0x4, offset = 0x4, fixed_abs, tag = 'smem constant byte address 0x4 - core index']
  #allocation1 [shape = 'u32[144,128]{1,0:T(1,128)}', space=vmem, size = 0x12000, scoped, tag = 'internal scratch']
  %s0 = inlined_call_operand.vmem [shape: f32[32,32], index: 0, kind: input, shape index: {}]
  %s1 = inlined_call_operand.vmem [shape: f32[2,128,32], index: 1, kind: input, shape index: {}]
  %s2 = inlined_call_operand.vmem [shape: f32[2,8,32], index: 2, kind: input, shape index: {}]
  %s3 = inlined_call_operand.hbm [shape: f32[2,8,32], index: 3, kind: output, shape index: {0}]
  %s4 = inlined_call_operand.hbm [shape: f32[2,8,128], index: 4, kind: output, shape index: {1}]
  %5 = xla_tuple %s3, %s4
  %s6 = sld [smem:[#allocation0]]
  $region30: #{tpu_custom_call.1} parent=0
    _
  %s8 = ssub.s32 1, %s6
  %s9 = scalar_select 0, %s8, %s6
  $region1: #{tpu_custom_call.1} parent=0
    #allocation2 [shape = 'u8[8192]{0}', space=vmem, size = 0x2000, scoped, tag = 'output window, operand 0, single buffered']
    #allocation3 [shape = 's32[1]{0}', space=sflag, size = 0x4, scoped, tag = 'scoped memory for tpu_custom_call.1']
    #allocation4 [shape = 'u8[8192]{0}', space=vmem, size = 0x2000, scoped, tag = 'output window, operand 1, single buffered']
    #allocation5 [shape = 's32[1]{0}', space=sflag, size = 0x4, scoped, tag = 'scoped memory for tpu_custom_call.1']
    %10 = vsyncpa [#allocation3], 0
    %11 = vsyncpa [#allocation5], 0
    // Predicated region
    $region2: #{tpu_custom_call.1} parent=1 // pred_check
      _
    $region3: #{tpu_custom_call.1} parent=1 // pred_check_branch
      %13 = sbr.rel (0) target = $region5
    $region4: #{tpu_custom_call.1} parent=1 // pred_region
      _
    $region5: #{tpu_custom_call.1} parent=1 // pred_fallthru
      _
    // Predicated region
    $region6: #{tpu_custom_call.1} parent=1 // pred_check
      _
    $region7: #{tpu_custom_call.1} parent=1 // pred_check_branch
      %15 = sbr.rel (0) target = $region9
    $region8: #{tpu_custom_call.1} parent=1 // pred_region
      _
    $region9: #{tpu_custom_call.1} parent=1 // pred_fallthru
      _
    // Predicated region
    $region10: #{tpu_custom_call.1} parent=1 // pred_check
      _
    $region11: #{tpu_custom_call.1} parent=1 // pred_check_branch
      %17 = sbr.rel (0) target = $region13
    $region12: #{tpu_custom_call.1} parent=1 // pred_region
      _
    $region13: #{tpu_custom_call.1} parent=1 // pred_fallthru
      _
    %v18 = vld [vmem:[%s0] sm:$0xff]
    %v19 = vld [vmem:[%s0 + $0x8] sm:$0xff]
    %v20 = vld [vmem:[%s0 + $0x10] sm:$0xff]
    %v21 = vld [vmem:[%s0 + $0x18] sm:$0xff]
    %v22 = vld [vmem:[%s1] sm:$0xff]
    %v23 = vld [vmem:[%s1 + $0x8] sm:$0xff]
    %v24 = vld [vmem:[%s1 + $0x10] sm:$0xff]
    %v25 = vld [vmem:[%s1 + $0x18] sm:$0xff]
    %v26 = vld [vmem:[%s1 + $0x20] sm:$0xff]
    %v27 = vld [vmem:[%s1 + $0x28] sm:$0xff]
    %v28 = vld [vmem:[%s1 + $0x30] sm:$0xff]
    %v29 = vld [vmem:[%s1 + $0x38] sm:$0xff]
    %v30 = vld [vmem:[%s1 + $0x40] sm:$0xff]
    %v31 = vld [vmem:[%s1 + $0x48] sm:$0xff]
    %v32 = vld [vmem:[%s1 + $0x50] sm:$0xff]
    %v33 = vld [vmem:[%s1 + $0x58] sm:$0xff]
    %v34 = vld [vmem:[%s1 + $0x60] sm:$0xff]
    %v35 = vld [vmem:[%s1 + $0x68] sm:$0xff]
    %v36 = vld [vmem:[%s1 + $0x70] sm:$0xff]
    %v37 = vld [vmem:[%s1 + $0x78] sm:$0xff]
    %v38 = vld [vmem:[%s1 + $0x80] sm:$0xff]
    %v39 = vld [vmem:[%s1 + $0x88] sm:$0xff]
    %v40 = vld [vmem:[%s1 + $0x90] sm:$0xff]
    %v41 = vld [vmem:[%s1 + $0x98] sm:$0xff]
    %v42 = vld [vmem:[%s1 + $0xa0] sm:$0xff]
    %v43 = vld [vmem:[%s1 + $0xa8] sm:$0xff]
    %v44 = vld [vmem:[%s1 + $0xb0] sm:$0xff]
    %v45 = vld [vmem:[%s1 + $0xb8] sm:$0xff]
    %v46 = vld [vmem:[%s1 + $0xc0] sm:$0xff]
    %v47 = vld [vmem:[%s1 + $0xc8] sm:$0xff]
    %v48 = vld [vmem:[%s1 + $0xd0] sm:$0xff]
    %v49 = vld [vmem:[%s1 + $0xd8] sm:$0xff]
    %v50 = vld [vmem:[%s1 + $0xe0] sm:$0xff]
    %v51 = vld [vmem:[%s1 + $0xe8] sm:$0xff]
    %v52 = vld [vmem:[%s1 + $0xf0] sm:$0xff]
    %v53 = vld [vmem:[%s1 + $0xf8] sm:$0xff]
    %v54 = vld [vmem:[%s2] sm:$0xff]
    %v55 = vld [vmem:[%s2 + $0x8] sm:$0xff]
    %vm56 = vcmask 261120
    %v58 = vsel %vm56, %v54, 0
    %v61 = vsel %vm56, %v55, 0
    %63 = vmatprep.subr.mxu0 0.0
    %64 = vmatpush1.msra.mxu0 %v18
    %65 = vmatprep.subr.mxu0 0.0
    %66 = vmatpush1.msra.mxu0 %v19
    %67 = vmatprep.subr.mxu0 0.0
    %68 = vmatpush1.msra.mxu0 %v20
    %69 = vmatprep.subr.mxu0 0.0
    %70 = vmatpush1.msra.mxu0 %v21
    %71 = vmatprep.subr.mxu0 0.0
    %72 = vmatpush1.msra.mxu0 0.0
    %73 = vmatprep.subr.mxu0 0.0
    %74 = vmatpush1.msra.mxu0 0.0
    %75 = vmatprep.subr.mxu0 0.0
    %76 = vmatpush1.msra.mxu0 0.0
    %77 = vmatprep.subr.mxu0 0.0
    %78 = vmatpush1.msra.mxu0 0.0
    %79 = vmatprep.subr.mxu0 0.0
    %80 = vmatpush1.msra.mxu0 0.0
    %81 = vmatprep.subr.mxu0 0.0
    %82 = vmatpush1.msra.mxu0 0.0
    %83 = vmatprep.subr.mxu0 0.0
    %84 = vmatpush1.msra.mxu0 0.0
    %85 = vmatprep.subr.mxu0 0.0
    %86 = vmatpush1.msra.mxu0 0.0
    %87 = vmatprep.subr.mxu0 0.0
    %88 = vmatpush1.msra.mxu0 0.0
    %89 = vmatprep.subr.mxu0 0.0
    %90 = vmatpush1.msra.mxu0 0.0
    %91 = vmatprep.subr.mxu0 0.0
    %92 = vmatpush1.msra.mxu0 0.0
    %93 = vmatprep.subr.mxu0 0.0
    %94 = vmatpush1.msra.mxu0 0.0
    %95 = vmatprep.subr.mxu0 0.0
    %96 = vmatpush1.msra.mxu0 0.0
    %97 = vmatprep.subr.mxu0 0.0
    %98 = vmatpush1.msra.mxu0 0.0
    %99 = vmatprep.subr.mxu0 0.0
    %100 = vmatpush1.msra.mxu0 0.0
    %101 = vmatprep.subr.mxu0 0.0
    %102 = vmatpush1.msra.mxu0 0.0
    %103 = vmatprep.subr.mxu0 0.0
    %104 = vmatpush1.msra.mxu0 0.0
    %105 = vmatprep.subr.mxu0 0.0
    %106 = vmatpush1.msra.mxu0 0.0
    %107 = vmatprep.subr.mxu0 0.0
    %108 = vmatpush1.msra.mxu0 0.0
    %109 = vmatprep.subr.mxu0 0.0
    %110 = vmatpush1.msra.mxu0 0.0
    %111 = vmatprep.subr.mxu0 0.0
    %112 = vmatpush1.msra.mxu0 0.0
    %113 = vmatprep.subr.mxu0 0.0
    %114 = vmatpush1.msra.mxu0 0.0
    %115 = vmatprep.subr.mxu0 0.0
    %116 = vmatpush1.msra.mxu0 0.0
    %117 = vmatprep.subr.mxu0 0.0
    %118 = vmatpush1.msra.mxu0 0.0
    %119 = vmatprep.subr.mxu0 0.0
    %120 = vmatpush1.msra.mxu0 0.0
    %121 = vmatprep.subr.mxu0 0.0
    %122 = vmatpush1.msra.mxu0 0.0
    %123 = vmatprep.subr.mxu0 0.0
    %124 = vmatpush1.msra.mxu0 0.0
    %125 = vmatprep.subr.mxu0 0.0
    %126 = vmatpush1.msra.mxu0 0.0
    %127 = vmatprep.mubr.f32.mxu0 0.0
    %128 = vmatmul.mubr.f32.gmra.mrb[0].mxu0 %v58
    %v129 = vpop.f32.mrb[0].mxu0
    %v130 = vadd.f32 0.0, %v129
    %v131 = vpop.f32.mrb[0].mxu0
    %132 = vmatprep.mubr.f32.mxu0 0.0
    %133 = vmatmul.mubr.f32.gmra.mrb[0].mxu0 %v61
    %v134 = vpop.f32.mrb[0].mxu0
    %v135 = vadd.f32 0.0, %v134
    %v136 = vpop.f32.mrb[0].mxu0
    %137 = vdwg.mxu0
    %v139 = vsel %vm56, %v130, 0
    %v142 = vsel %vm56, %v22, 0
    %v145 = vsel %vm56, %v23, 0
    %v148 = vsel %vm56, %v24, 0
    %v151 = vsel %vm56, %v25, 0
    %v154 = vsel %vm56, %v26, 0
    %v157 = vsel %vm56, %v27, 0
    %v160 = vsel %vm56, %v28, 0
    %v163 = vsel %vm56, %v29, 0
    %v166 = vsel %vm56, %v30, 0
    %v169 = vsel %vm56, %v31, 0
    %v172 = vsel %vm56, %v32, 0
    %v175 = vsel %vm56, %v33, 0
    %v178 = vsel %vm56, %v34, 0
    %v181 = vsel %vm56, %v35, 0
    %v184 = vsel %vm56, %v36, 0
    %v187 = vsel %vm56, %v37, 0
    %189 = vmatprep.subr.mxu0 0.0
    %190 = vmatpush1.xpose.msra.mxu0 %v142
    %191 = vmatprep.subr.mxu0 0.0
    %192 = vmatpush1.xpose.msra.mxu0 %v145
    %193 = vmatprep.subr.mxu0 0.0
    %194 = vmatpush1.xpose.msra.mxu0 %v148
    %195 = vmatprep.subr.mxu0 0.0
    %196 = vmatpush1.xpose.msra.mxu0 %v151
    %197 = vmatprep.subr.mxu0 0.0
    %198 = vmatpush1.xpose.msra.mxu0 %v154
    %199 = vmatprep.subr.mxu0 0.0
    %200 = vmatpush1.xpose.msra.mxu0 %v157
    %201 = vmatprep.subr.mxu0 0.0
    %202 = vmatpush1.xpose.msra.mxu0 %v160
    %203 = vmatprep.subr.mxu0 0.0
    %204 = vmatpush1.xpose.msra.mxu0 %v163
    %205 = vmatprep.subr.mxu0 0.0
    %206 = vmatpush1.xpose.msra.mxu0 %v166
    %207 = vmatprep.subr.mxu0 0.0
    %208 = vmatpush1.xpose.msra.mxu0 %v169
    %209 = vmatprep.subr.mxu0 0.0
    %210 = vmatpush1.xpose.msra.mxu0 %v172
    %211 = vmatprep.subr.mxu0 0.0
    %212 = vmatpush1.xpose.msra.mxu0 %v175
    %213 = vmatprep.subr.mxu0 0.0
    %214 = vmatpush1.xpose.msra.mxu0 %v178
    %215 = vmatprep.subr.mxu0 0.0
    %216 = vmatpush1.xpose.msra.mxu0 %v181
    %217 = vmatprep.subr.mxu0 0.0
    %218 = vmatpush1.xpose.msra.mxu0 %v184
    %219 = vmatprep.subr.mxu0 0.0
    %220 = vmatpush1.xpose.msra.mxu0 %v187
    %221 = vmatprep.subr.mxu0 0.0
    %222 = vmatpush1.xpose.msra.mxu0 0.0
    %223 = vmatprep.subr.mxu0 0.0
    %224 = vmatpush1.xpose.msra.mxu0 0.0
    %225 = vmatprep.subr.mxu0 0.0
    %226 = vmatpush1.xpose.msra.mxu0 0.0
    %227 = vmatprep.subr.mxu0 0.0
    %228 = vmatpush1.xpose.msra.mxu0 0.0
    %229 = vmatprep.subr.mxu0 0.0
    %230 = vmatpush1.xpose.msra.mxu0 0.0
    %231 = vmatprep.subr.mxu0 0.0
    %232 = vmatpush1.xpose.msra.mxu0 0.0
    %233 = vmatprep.subr.mxu0 0.0
    %234 = vmatpush1.xpose.msra.mxu0 0.0
    %235 = vmatprep.subr.mxu0 0.0
    %236 = vmatpush1.xpose.msra.mxu0 0.0
    %237 = vmatprep.subr.mxu0 0.0
    %238 = vmatpush1.xpose.msra.mxu0 0.0
    %239 = vmatprep.subr.mxu0 0.0
    %240 = vmatpush1.xpose.msra.mxu0 0.0
    %241 = vmatprep.subr.mxu0 0.0
    %242 = vmatpush1.xpose.msra.mxu0 0.0
    %243 = vmatprep.subr.mxu0 0.0
    %244 = vmatpush1.xpose.msra.mxu0 0.0
    %245 = vmatprep.subr.mxu0 0.0
    %246 = vmatpush1.xpose.msra.mxu0 0.0
    %247 = vmatprep.subr.mxu0 0.0
    %248 = vmatpush1.xpose.msra.mxu0 0.0
    %249 = vmatprep.subr.mxu0 0.0
    %250 = vmatpush1.xpose.msra.mxu0 0.0
    %251 = vmatprep.subr.mxu0 0.0
    %252 = vmatpush1.xpose.msra.mxu0 0.0
    %253 = vmatprep.mubr.f32.mxu0 0.0
    %254 = vmatmul.mubr.f32.gmra.mrb[0].mxu0 %v139
    %v255 = vpop.f32.mrb[0].mxu0
    %v256 = vadd.f32 0.0, %v255
    %v257 = vpop.f32.mrb[0].mxu0
    %258 = vdwg.mxu0
    %v260 = vsel %vm56, %v135, 0
    %v263 = vsel %vm56, %v38, 0
    %v266 = vsel %vm56, %v39, 0
    %v269 = vsel %vm56, %v40, 0
    %v272 = vsel %vm56, %v41, 0
    %v275 = vsel %vm56, %v42, 0
    %v278 = vsel %vm56, %v43, 0
    %v281 = vsel %vm56, %v44, 0
    %v284 = vsel %vm56, %v45, 0
    %v287 = vsel %vm56, %v46, 0
    %v290 = vsel %vm56, %v47, 0
    %v293 = vsel %vm56, %v48, 0
    %v296 = vsel %vm56, %v49, 0
    %v299 = vsel %vm56, %v50, 0
    %v302 = vsel %vm56, %v51, 0
    %v305 = vsel %vm56, %v52, 0
    %v308 = vsel %vm56, %v53, 0
    %310 = vmatprep.subr.mxu0 0.0
    %311 = vmatpush1.xpose.msra.mxu0 %v263
    %312 = vmatprep.subr.mxu0 0.0
    %313 = vmatpush1.xpose.msra.mxu0 %v266
    %314 = vmatprep.subr.mxu0 0.0
    %315 = vmatpush1.xpose.msra.mxu0 %v269
    %316 = vmatprep.subr.mxu0 0.0
    %317 = vmatpush1.xpose.msra.mxu0 %v272
    %318 = vmatprep.subr.mxu0 0.0
    %319 = vmatpush1.xpose.msra.mxu0 %v275
    %320 = vmatprep.subr.mxu0 0.0
    %321 = vmatpush1.xpose.msra.mxu0 %v278
    %322 = vmatprep.subr.mxu0 0.0
    %323 = vmatpush1.xpose.msra.mxu0 %v281
    %324 = vmatprep.subr.mxu0 0.0
    %325 = vmatpush1.xpose.msra.mxu0 %v284
    %326 = vmatprep.subr.mxu0 0.0
    %327 = vmatpush1.xpose.msra.mxu0 %v287
    %328 = vmatprep.subr.mxu0 0.0
    %329 = vmatpush1.xpose.msra.mxu0 %v290
    %330 = vmatprep.subr.mxu0 0.0
    %331 = vmatpush1.xpose.msra.mxu0 %v293
    %332 = vmatprep.subr.mxu0 0.0
    %333 = vmatpush1.xpose.msra.mxu0 %v296
    %334 = vmatprep.subr.mxu0 0.0
    %335 = vmatpush1.xpose.msra.mxu0 %v299
    %336 = vmatprep.subr.mxu0 0.0
    %337 = vmatpush1.xpose.msra.mxu0 %v302
    %338 = vmatprep.subr.mxu0 0.0
    %339 = vmatpush1.xpose.msra.mxu0 %v305
    %340 = vmatprep.subr.mxu0 0.0
    %341 = vmatpush1.xpose.msra.mxu0 %v308
    %342 = vmatprep.subr.mxu0 0.0
    %343 = vmatpush1.xpose.msra.mxu0 0.0
    %344 = vmatprep.subr.mxu0 0.0
    %345 = vmatpush1.xpose.msra.mxu0 0.0
    %346 = vmatprep.subr.mxu0 0.0
    %347 = vmatpush1.xpose.msra.mxu0 0.0
    %348 = vmatprep.subr.mxu0 0.0
    %349 = vmatpush1.xpose.msra.mxu0 0.0
    %350 = vmatprep.subr.mxu0 0.0
    %351 = vmatpush1.xpose.msra.mxu0 0.0
    %352 = vmatprep.subr.mxu0 0.0
    %353 = vmatpush1.xpose.msra.mxu0 0.0
    %354 = vmatprep.subr.mxu0 0.0
    %355 = vmatpush1.xpose.msra.mxu0 0.0
    %356 = vmatprep.subr.mxu0 0.0
    %357 = vmatpush1.xpose.msra.mxu0 0.0
    %358 = vmatprep.subr.mxu0 0.0
    %359 = vmatpush1.xpose.msra.mxu0 0.0
    %360 = vmatprep.subr.mxu0 0.0
    %361 = vmatpush1.xpose.msra.mxu0 0.0
    %362 = vmatprep.subr.mxu0 0.0
    %363 = vmatpush1.xpose.msra.mxu0 0.0
    %364 = vmatprep.subr.mxu0 0.0
    %365 = vmatpush1.xpose.msra.mxu0 0.0
    %366 = vmatprep.subr.mxu0 0.0
    %367 = vmatpush1.xpose.msra.mxu0 0.0
    %368 = vmatprep.subr.mxu0 0.0
    %369 = vmatpush1.xpose.msra.mxu0 0.0
    %370 = vmatprep.subr.mxu0 0.0
    %371 = vmatpush1.xpose.msra.mxu0 0.0
    %372 = vmatprep.subr.mxu0 0.0
    %373 = vmatpush1.xpose.msra.mxu0 0.0
    %374 = vmatprep.mubr.f32.mxu0 0.0
    %375 = vmatmul.mubr.f32.gmra.mrb[0].mxu0 %v260
    %v376 = vpop.f32.mrb[0].mxu0
    %v377 = vadd.f32 0.0, %v376
    %v378 = vpop.f32.mrb[0].mxu0
    %379 = vdwg.mxu0
    %v380 = vlaneseq
    %v381 = vand.u32 %v380, 127
    %vm382 = vcmp.lt.s32.totalorder %v381, 8
    %v383 = vsel %vm382, %v256, -1e+30
    %v384 = vsel %vm382, %v377, -1e+30
    %385 = vmax.xlane.f32.xlu0 %v383
    %v386 = vpop.xlane.xlu0 %385
    %387 = vmax.xlane.f32.xlu0 %v384
    %v388 = vpop.xlane.xlu0 %387
    %v389 = vsub.f32 %v383, %v386
    %v390 = vsub.f32 %v384, %v388
    %v391 = vmul.f32 %v389, 1.442695
    %v392 = vpow.pop %v391
    %v393 = vmul.f32 %v390, 1.442695
    %v394 = vpow.pop %v393
    %395 = vadd.xlane.f32.xlu0 %v392
    %v396 = vpop.xlane.xlu0 %395
    %397 = vadd.xlane.f32.xlu0 %v394
    %v398 = vpop.xlane.xlu0 %397
    %v399 = vrcp.pop %v396
    %v400 = vrcp.pop %v398
    %v401 = vmul.f32 %v392, %v399
    %v402 = vmul.f32 %v394, %v400
    %403 = vmatprep.subr.mxu0 0.0
    %404 = vmatpush1.msra.mxu0 %v22
    %405 = vmatprep.subr.mxu0 0.0
    %406 = vmatpush1.msra.mxu0 %v23
    %407 = vmatprep.subr.mxu0 0.0
    %408 = vmatpush1.msra.mxu0 %v24
    %409 = vmatprep.subr.mxu0 0.0
    %410 = vmatpush1.msra.mxu0 %v25
    %411 = vmatprep.subr.mxu0 0.0
    %412 = vmatpush1.msra.mxu0 %v26
    %413 = vmatprep.subr.mxu0 0.0
    %414 = vmatpush1.msra.mxu0 %v27
    %415 = vmatprep.subr.mxu0 0.0
    %416 = vmatpush1.msra.mxu0 %v28
    %417 = vmatprep.subr.mxu0 0.0
    %418 = vmatpush1.msra.mxu0 %v29
    %419 = vmatprep.subr.mxu0 0.0
    %420 = vmatpush1.msra.mxu0 %v30
    %421 = vmatprep.subr.mxu0 0.0
    %422 = vmatpush1.msra.mxu0 %v31
    %423 = vmatprep.subr.mxu0 0.0
    %424 = vmatpush1.msra.mxu0 %v32
    %425 = vmatprep.subr.mxu0 0.0
    %426 = vmatpush1.msra.mxu0 %v33
    %427 = vmatprep.subr.mxu0 0.0
    %428 = vmatpush1.msra.mxu0 %v34
    %429 = vmatprep.subr.mxu0 0.0
    %430 = vmatpush1.msra.mxu0 %v35
    %431 = vmatprep.subr.mxu0 0.0
    %432 = vmatpush1.msra.mxu0 %v36
    %433 = vmatprep.subr.mxu0 0.0
    %434 = vmatpush1.msra.mxu0 %v37
    %435 = vmatprep.subr.mxu0 0.0
    %436 = vmatpush1.msra.mxu0 0.0
    %437 = vmatprep.subr.mxu0 0.0
    %438 = vmatpush1.msra.mxu0 0.0
    %439 = vmatprep.subr.mxu0 0.0
    %440 = vmatpush1.msra.mxu0 0.0
    %441 = vmatprep.subr.mxu0 0.0
    %442 = vmatpush1.msra.mxu0 0.0
    %443 = vmatprep.subr.mxu0 0.0
    %444 = vmatpush1.msra.mxu0 0.0
    %445 = vmatprep.subr.mxu0 0.0
    %446 = vmatpush1.msra.mxu0 0.0
    %447 = vmatprep.subr.mxu0 0.0
    %448 = vmatpush1.msra.mxu0 0.0
    %449 = vmatprep.subr.mxu0 0.0
    %450 = vmatpush1.msra.mxu0 0.0
    %451 = vmatprep.subr.mxu0 0.0
    %452 = vmatpush1.msra.mxu0 0.0
    %453 = vmatprep.subr.mxu0 0.0
    %454 = vmatpush1.msra.mxu0 0.0
    %455 = vmatprep.subr.mxu0 0.0
    %456 = vmatpush1.msra.mxu0 0.0
    %457 = vmatprep.subr.mxu0 0.0
    %458 = vmatpush1.msra.mxu0 0.0
    %459 = vmatprep.subr.mxu0 0.0
    %460 = vmatpush1.msra.mxu0 0.0
    %461 = vmatprep.subr.mxu0 0.0
    %462 = vmatpush1.msra.mxu0 0.0
    %463 = vmatprep.subr.mxu0 0.0
    %464 = vmatpush1.msra.mxu0 0.0
    %465 = vmatprep.subr.mxu0 0.0
    %466 = vmatpush1.msra.mxu0 0.0
    %467 = vmatprep.mubr.f32.mxu0 0.0
    %468 = vmatmul.mubr.f32.gmra.mrb[0].mxu0 %v401
    %v469 = vpop.f32.mrb[0].mxu0
    %v470 = vadd.f32 0.0, %v469
    %v471 = vpop.f32.mrb[0].mxu0
    %472 = vdwg.mxu0
    %473 = vmatprep.subr.mxu0 0.0
    %474 = vmatpush1.msra.mxu0 %v38
    %475 = vmatprep.subr.mxu0 0.0
    %476 = vmatpush1.msra.mxu0 %v39
    %477 = vmatprep.subr.mxu0 0.0
    %478 = vmatpush1.msra.mxu0 %v40
    %479 = vmatprep.subr.mxu0 0.0
    %480 = vmatpush1.msra.mxu0 %v41
    %481 = vmatprep.subr.mxu0 0.0
    %482 = vmatpush1.msra.mxu0 %v42
    %483 = vmatprep.subr.mxu0 0.0
    %484 = vmatpush1.msra.mxu0 %v43
    %485 = vmatprep.subr.mxu0 0.0
    %486 = vmatpush1.msra.mxu0 %v44
    %487 = vmatprep.subr.mxu0 0.0
    %488 = vmatpush1.msra.mxu0 %v45
    %489 = vmatprep.subr.mxu0 0.0
    %490 = vmatpush1.msra.mxu0 %v46
    %491 = vmatprep.subr.mxu0 0.0
    %492 = vmatpush1.msra.mxu0 %v47
    %493 = vmatprep.subr.mxu0 0.0
    %494 = vmatpush1.msra.mxu0 %v48
    %495 = vmatprep.subr.mxu0 0.0
    %496 = vmatpush1.msra.mxu0 %v49
    %497 = vmatprep.subr.mxu0 0.0
    %498 = vmatpush1.msra.mxu0 %v50
    %499 = vmatprep.subr.mxu0 0.0
    %500 = vmatpush1.msra.mxu0 %v51
    %501 = vmatprep.subr.mxu0 0.0
    %502 = vmatpush1.msra.mxu0 %v52
    %503 = vmatprep.subr.mxu0 0.0
    %504 = vmatpush1.msra.mxu0 %v53
    %505 = vmatprep.subr.mxu0 0.0
    %506 = vmatpush1.msra.mxu0 0.0
    %507 = vmatprep.subr.mxu0 0.0
    %508 = vmatpush1.msra.mxu0 0.0
    %509 = vmatprep.subr.mxu0 0.0
    %510 = vmatpush1.msra.mxu0 0.0
    %511 = vmatprep.subr.mxu0 0.0
    %512 = vmatpush1.msra.mxu0 0.0
    %513 = vmatprep.subr.mxu0 0.0
    %514 = vmatpush1.msra.mxu0 0.0
    %515 = vmatprep.subr.mxu0 0.0
    %516 = vmatpush1.msra.mxu0 0.0
    %517 = vmatprep.subr.mxu0 0.0
    %518 = vmatpush1.msra.mxu0 0.0
    %519 = vmatprep.subr.mxu0 0.0
    %520 = vmatpush1.msra.mxu0 0.0
    %521 = vmatprep.subr.mxu0 0.0
    %522 = vmatpush1.msra.mxu0 0.0
    %523 = vmatprep.subr.mxu0 0.0
    %524 = vmatpush1.msra.mxu0 0.0
    %525 = vmatprep.subr.mxu0 0.0
    %526 = vmatpush1.msra.mxu0 0.0
    %527 = vmatprep.subr.mxu0 0.0
    %528 = vmatpush1.msra.mxu0 0.0
    %529 = vmatprep.subr.mxu0 0.0
    %530 = vmatpush1.msra.mxu0 0.0
    %531 = vmatprep.subr.mxu0 0.0
    %532 = vmatpush1.msra.mxu0 0.0
    %533 = vmatprep.subr.mxu0 0.0
    %534 = vmatpush1.msra.mxu0 0.0
    %535 = vmatprep.subr.mxu0 0.0
    %536 = vmatpush1.msra.mxu0 0.0
    %537 = vmatprep.mubr.f32.mxu0 0.0
    %538 = vmatmul.mubr.f32.gmra.mrb[0].mxu0 %v402
    %v539 = vpop.f32.mrb[0].mxu0
    %v540 = vadd.f32 0.0, %v539
    %v541 = vpop.f32.mrb[0].mxu0
    %542 = vdwg.mxu0
    %543 = vst.msk [vmem:[#allocation2] sm:$0xff] %vm56, %v470
    %544 = vst.msk [vmem:[#allocation2 + $0x8] sm:$0xff] %vm56, %v540
    %545 = vst [vmem:[#allocation4] sm:$0xff] %v401
    %546 = vst [vmem:[#allocation4 + $0x8] sm:$0xff] %v402
    // Predicated region
    $region14: #{tpu_custom_call.1} parent=1 // pred_check
      _
    $region15: #{tpu_custom_call.1} parent=1 // pred_check_branch
      %548 = sbr.rel (0) target = $region17
    $region16: #{tpu_custom_call.1} parent=1 // pred_region
      %s550 = ssub.s32 256, 256
      %551 = vsyncadd [#allocation3], %s550
      %s552 = sshll.u32 [#allocation2], 4
      %s553 = int_to_ptr.vmem [resolvable:$true] %s552
      %558 = dma.vmem_to_hbm [thread:$0]  %s553, 256, %s3, [#allocation3], 128, 128, 8
    $region17: #{tpu_custom_call.1} parent=1 // pred_fallthru
      _
    // Predicated region
    $region18: #{tpu_custom_call.1} parent=1 // pred_check
      _
    $region19: #{tpu_custom_call.1} parent=1 // pred_check_branch
      %560 = sbr.rel (0) target = $region21
    $region20: #{tpu_custom_call.1} parent=1 // pred_region
      %s562 = ssub.s32 256, 256
      %563 = vsyncadd [#allocation5], %s562
      %s564 = sshll.u32 [#allocation4], 4
      %s565 = int_to_ptr.vmem [resolvable:$true] %s564
      %570 = dma.vmem_to_hbm [thread:$0]  %s565, 256, %s4, [#allocation5], 128, 128, 8
    $region21: #{tpu_custom_call.1} parent=1 // pred_fallthru
      _
    // Predicated region
    $region22: #{tpu_custom_call.1} parent=1 // pred_check
      _
    $region23: #{tpu_custom_call.1} parent=1 // pred_check_branch
      %572 = sbr.rel (0) target = $region25
    $region24: #{tpu_custom_call.1} parent=1 // pred_region
      %573 = dma.done [#allocation3], 256
    $region25: #{tpu_custom_call.1} parent=1 // pred_fallthru
      _
    // Predicated region
    $region26: #{tpu_custom_call.1} parent=1 // pred_check
      _
    $region27: #{tpu_custom_call.1} parent=1 // pred_check_branch
      %575 = sbr.rel (0) target = $region29
    $region28: #{tpu_custom_call.1} parent=1 // pred_region
      %576 = dma.done [#allocation5], 256
    $region29: #{tpu_custom_call.1} parent=1 // pred_fallthru
      _
    %577 = vsyncpa [#allocation3], 1
    %578 = vsyncpa [#allocation5], 1

</llo_original>
